<compile_context>
chip_gen: v6e
topology: v6e:2x2x1
jax: 0.10.0
libtpu: 0.0.40
codegen_flags: <defaults>
</compile_context>

<pallas_src>
import functools

import jax
import jax.numpy as jnp
from jax.experimental import pallas as pl
from jax.experimental.pallas import tpu as pltpu


# ----------------------------- helpers -------------------------------------

def _round_up(n, m):
    return ((n + m - 1) // m) * m


def _pad2d(a, rows, cols):
    return jnp.pad(a, ((0, rows - a.shape[0]), (0, cols - a.shape[1])))


def _leaky_relu(v, negative_slope=0.1):
    return jnp.where(v >= 0, v, negative_slope * v)


# ----------------------------- kernel ---------------------------------------

def _mlp_decoder_kernel(has_proj, has_proj2, *refs):
    """refs order: x, w1,b1, [wp1,bp1], w2,b2, w3,b3, [wp2,bp2], w4,b4, out."""
    it = iter(refs)
    x_ref = next(it)
    w1_ref, b1_ref = next(it), next(it)
    wp1_ref = bp1_ref = None
    if has_proj:
        wp1_ref, bp1_ref = next(it), next(it)
    w2_ref, b2_ref = next(it), next(it)
    w3_ref, b3_ref = next(it), next(it)
    wp2_ref = bp2_ref = None
    if has_proj2:
        wp2_ref, bp2_ref = next(it), next(it)
    w4_ref, b4_ref = next(it), next(it)
    o_ref = next(it)

    cdt = w1_ref.dtype                     # matmul operand dtype (bf16 or f32)
    x = x_ref[...]                         # (TILE_B, in_p) in compute dtype

    # ---- block 1: fc1 (+ folded bn1) -> leaky_relu -> (+ 0.1 * proj1(x)/x) --
    h = jnp.dot(x, w1_ref[...], preferred_element_type=jnp.float32) + b1_ref[...]
    h = _leaky_relu(h)
    if has_proj:
        ident = jnp.dot(x, wp1_ref[...], preferred_element_type=jnp.float32) + bp1_ref[...]
    else:
        ident = x.astype(jnp.float32)
    h = h + 0.1 * ident                    # (TILE_B, hid_p), f32

    # ---- block 2: fc2 (+ folded bn2) -> leaky_relu -> (+ 0.1 * identity) ----
    ident = h
    h = jnp.dot(h.astype(cdt), w2_ref[...], preferred_element_type=jnp.float32) + b2_ref[...]
    h = _leaky_relu(h)
    h = h + 0.1 * ident                    # (TILE_B, hid_p), f32

    # ---- block 3: fc3 (+ folded bn3) -> leaky_relu -> (+ 0.1 * proj2/ident) -
    ident_in = h
    h = jnp.dot(h.astype(cdt), w3_ref[...], preferred_element_type=jnp.float32) + b3_ref[...]
    h = _leaky_relu(h)
    if has_proj2:
        ident = (jnp.dot(ident_in.astype(cdt), wp2_ref[...],
                         preferred_element_type=jnp.float32) + bp2_ref[...])
    else:
        ident = ident_in
    h = h + 0.1 * ident                    # (TILE_B, out_p), f32

    # ---- final: fc4 (lane-dense padded output slab) -------------------------
    out = jnp.dot(h.astype(cdt), w4_ref[...], preferred_element_type=jnp.float32) + b4_ref[...]
    o_ref[...] = out.astype(o_ref.dtype)


# ----------------------------- parameters -----------------------------------

def init_mlp_decoder_params(key, in_dim, hidden_dim, out_dim, binary=1):
    """PyTorch-style params: Linear (out,in) kaiming fan_out, BN eval stats."""
    keys = jax.random.split(key, 6)

    def kaiming_linear(k, fan_in, fan_out):
        std = (2.0 / fan_out) ** 0.5       # kaiming_normal_(mode='fan_out', relu)
        w = jax.random.normal(k, (fan_out, fan_in), jnp.float32) * std
        return {"w": w, "b": jnp.zeros((fan_out,), jnp.float32)}

    def bn(features):
        return {"gamma": jnp.ones((features,), jnp.float32),
                "beta": jnp.zeros((features,), jnp.float32),
                "mean": jnp.zeros((features,), jnp.float32),
                "var": jnp.ones((features,), jnp.float32)}

    p = {
        "fc1": kaiming_linear(keys[0], in_dim, hidden_dim), "bn1": bn(hidden_dim),
        "fc2": kaiming_linear(keys[1], hidden_dim, hidden_dim), "bn2": bn(hidden_dim),
        "fc3": kaiming_linear(keys[2], hidden_dim, out_dim), "bn3": bn(out_dim),
        "fc4": kaiming_linear(keys[3], out_dim, binary),
    }
    if hidden_dim != in_dim:
        p["proj1"] = kaiming_linear(keys[4], in_dim, hidden_dim)
    if out_dim != hidden_dim:
        p["proj2"] = kaiming_linear(keys[5], hidden_dim, out_dim)
    return p


def fold_and_pad_params(p, compute_dtype=jnp.bfloat16, eps=1e-5):
    """Fold eval-mode BN into linears, transpose to (in,out), pad dims to 128."""
    def fold(lin, bnp):
        scale = bnp["gamma"] / jnp.sqrt(bnp["var"] + eps)     # per output feature
        w = lin["w"] * scale[:, None]
        b = (lin["b"] - bnp["mean"]) * scale + bnp["beta"]
        return w, b

    in_dim = p["fc1"]["w"].shape[1]
    hid = p["fc1"]["w"].shape[0]
    out_dim = p["fc3"]["w"].shape[0]
    binary = p["fc4"]["w"].shape[0]
    in_p = _round_up(in_dim, 128)
    hid_p = _round_up(hid, 128)
    out_p = _round_up(out_dim, 128)
    bin_p = _round_up(binary, 128)

    def prep(w, b, rows_p, cols_p):
        wt = _pad2d(w.T, rows_p, cols_p).astype(compute_dtype)        # (in_p, out_p)
        bb = _pad2d(b.reshape(1, -1), 1, cols_p).astype(jnp.float32)  # (1, out_p)
        return wt, bb

    kp = {}
    w, b = fold(p["fc1"], p["bn1"]); kp["w1"], kp["b1"] = prep(w, b, in_p, hid_p)
    w, b = fold(p["fc2"], p["bn2"]); kp["w2"], kp["b2"] = prep(w, b, hid_p, hid_p)
    w, b = fold(p["fc3"], p["bn3"]); kp["w3"], kp["b3"] = prep(w, b, hid_p, out_p)
    kp["w4"], kp["b4"] = prep(p["fc4"]["w"], p["fc4"]["b"], out_p, bin_p)
    if "proj1" in p:
        kp["wp1"], kp["bp1"] = prep(p["proj1"]["w"], p["proj1"]["b"], in_p, hid_p)
    if "proj2" in p:
        kp["wp2"], kp["bp2"] = prep(p["proj2"]["w"], p["proj2"]["b"], hid_p, out_p)
    return kp


# ----------------------------- forward wrapper -------------------------------

@functools.partial(jax.jit, static_argnames=("binary",))
def mlp_decoder_forward(x, kp, binary):
    B, in_dim = x.shape
    in_p, hid_p = kp["w1"].shape
    out_p = kp["w3"].shape[1]
    bin_p = kp["w4"].shape[1]
    compute_dtype = kp["w1"].dtype
    has_proj = "wp1" in kp
    has_proj2 = "wp2" in kp

    # --- batch tile: biggest multiple of 8 fitting a conservative VMEM budget.
    weight_bytes = sum(int(v.size) * v.dtype.itemsize for v in kp.values())
    dsz = jnp.dtype(compute_dtype).itemsize
    # per-row: double-buffered x + out tiles plus ~4 live f32 activation temps.
    per_row = 2 * in_p * dsz + 2 * bin_p * 4 + 4 * (in_p + hid_p + out_p) * 4
    budget = 40 * 1024 * 1024                  # conservative: fits v7x 64 MiB VMEM
    tile_b = max(8, min(512, (budget - weight_bytes) // per_row))
    tile_b = max(8, (int(tile_b) // 8) * 8)
    tile_b = min(tile_b, _round_up(B, 8))
    grid_b = pl.cdiv(B, tile_b)
    b_pad = grid_b * tile_b

    x_p = jnp.pad(x.astype(compute_dtype), ((0, b_pad - B), (0, in_p - in_dim)))

    args = [x_p, kp["w1"], kp["b1"]]
    if has_proj:
        args += [kp["wp1"], kp["bp1"]]
    args += [kp["w2"], kp["b2"], kp["w3"], kp["b3"]]
    if has_proj2:
        args += [kp["wp2"], kp["bp2"]]
    args += [kp["w4"], kp["b4"]]

    const = lambda i: (0, 0)                   # weights/biases stay VMEM-resident
    in_specs = [pl.BlockSpec((tile_b, in_p), lambda i: (i, 0))]
    in_specs += [pl.BlockSpec(a.shape, const) for a in args[1:]]
    out_specs = pl.BlockSpec((tile_b, bin_p), lambda i: (i, 0))

    flops = 2 * b_pad * (in_p * hid_p + hid_p * hid_p + hid_p * out_p + out_p * bin_p
                         + (in_p * hid_p if has_proj else 0)
                         + (hid_p * out_p if has_proj2 else 0))
    bytes_accessed = int(x_p.size) * dsz + weight_bytes + b_pad * bin_p * 4

    need = weight_bytes + 2 * tile_b * (in_p * dsz + bin_p * 4) + tile_b * per_row
    vmem_limit = int(min(64 * 1024 * 1024,
                         max(32 * 1024 * 1024, need + 8 * 1024 * 1024)))

    out = pl.pallas_call(
        functools.partial(_mlp_decoder_kernel, has_proj, has_proj2),
        out_shape=jax.ShapeDtypeStruct((b_pad, bin_p), jnp.float32),
        grid=(grid_b,),
        in_specs=in_specs,
        out_specs=out_specs,
        compiler_params=pltpu.CompilerParams(
            dimension_semantics=("parallel",),
            vmem_limit_bytes=vmem_limit),
        cost_estimate=pl.CostEstimate(
            flops=int(flops), transcendentals=0, bytes_accessed=int(bytes_accessed)),
    )(*args)
    return out[:B, :binary]


# ----------------------------- references -----------------------------------

def reference_forward(x, p, eps=1e-5):
    """Pure-JAX port of MLPDecoder.forward (eval mode), unfolded BN."""
    def leaky(v): return jnp.where(v >= 0, v, 0.1 * v)
    def lin(v, l): return v @ l["w"].T + l["b"]
    def bn(v, b): return (v - b["mean"]) / jnp.sqrt(b["var"] + eps) * b["gamma"] + b["beta"]

    ident = x
    h = leaky(bn(lin(x, p["fc1"]), p["bn1"]))
    if "proj1" in p:
        ident = lin(ident, p["proj1"])
    h = h + 0.1 * ident
    ident = h
    h = leaky(bn(lin(h, p["fc2"]), p["bn2"]))
    h = h + 0.1 * ident
    ident = h
    h = leaky(bn(lin(h, p["fc3"]), p["bn3"]))
    if "proj2" in p:
        ident = lin(ident, p["proj2"])
    h = h + 0.1 * ident
    return lin(h, p["fc4"])


def folded_reference(x, kp, binary):
    """Pure-JAX mirror of the kernel math using the same folded/padded params."""
    def leaky(v): return jnp.where(v >= 0, v, 0.1 * v)
    cdt = kp["w1"].dtype
    in_p = kp["w1"].shape[0]
    xf = jnp.pad(x, ((0, 0), (0, in_p - x.shape[1]))).astype(cdt)
    h = leaky(jnp.dot(xf, kp["w1"], preferred_element_type=jnp.float32) + kp["b1"])
    ident = (jnp.dot(xf, kp["wp1"], preferred_element_type=jnp.float32) + kp["bp1"]
             if "wp1" in kp else xf.astype(jnp.float32))
    h = h + 0.1 * ident
    ident = h
    h = leaky(jnp.dot(h.astype(cdt), kp["w2"], preferred_element_type=jnp.float32) + kp["b2"])
    h = h + 0.1 * ident
    ident_in = h
    h = leaky(jnp.dot(h.astype(cdt), kp["w3"], preferred_element_type=jnp.float32) + kp["b3"])
    ident = (jnp.dot(ident_in.astype(cdt), kp["wp2"], preferred_element_type=jnp.float32) + kp["bp2"]
             if "wp2" in kp else ident_in)
    h = h + 0.1 * ident
    out = jnp.dot(h.astype(cdt), kp["w4"], preferred_element_type=jnp.float32) + kp["b4"]
    return out[:, :binary]


def _randomize_bn(p, key):
    """Non-trivial eval-mode BN stats so BN folding is actually exercised."""
    new = dict(p)
    for name in ("bn1", "bn2", "bn3"):
        k1, k2, k3, k4, key = jax.random.split(key, 5)
        f = p[name]["gamma"].shape[0]
        new[name] = {
            "gamma": jax.random.uniform(k1, (f,), minval=0.5, maxval=1.5),
            "beta": 0.1 * jax.random.normal(k2, (f,)),
            "mean": 0.2 * jax.random.normal(k3, (f,)),
            "var": jax.random.uniform(k4, (f,), minval=0.5, maxval=1.5),
        }
    return new


# ----------------------------- main ------------------------------------------

if __name__ == "__main__":
    key = jax.random.PRNGKey(0)
    kx, kpar, kbn, k2x, k2p, k2bn = jax.random.split(key, 6)

    # Config 1: projections present (in!=hidden, out!=hidden), f32 + bf16 paths.
    B, IN_DIM, HIDDEN, OUT_DIM, BINARY = 8, 32, 64, 16, 1
    x = jax.random.normal(kx, (B, IN_DIM), jnp.float32)
    params = _randomize_bn(init_mlp_decoder_params(kpar, IN_DIM, HIDDEN, OUT_DIM, BINARY), kbn)
    ref = reference_forward(x, params)

    kp_f32 = fold_and_pad_params(params, jnp.float32)
    fold_ref_f32 = folded_reference(x, kp_f32, BINARY)
    out_f32 = jax.block_until_ready(mlp_decoder_forward(x, kp_f32, binary=BINARY))
    assert out_f32.shape == (B, BINARY), out_f32.shape
    assert jnp.allclose(out_f32, fold_ref_f32, atol=1e-3, rtol=1e-3), "f32 kernel mismatch"
    assert jnp.allclose(fold_ref_f32, ref, atol=3e-1, rtol=1e-1), "BN-fold semantics drift"

    kp_bf16 = fold_and_pad_params(params, jnp.bfloat16)
    fold_ref_bf16 = folded_reference(x, kp_bf16, BINARY)
    out_bf16 = jax.block_until_ready(mlp_decoder_forward(x, kp_bf16, binary=BINARY))
    assert out_bf16.shape == (B, BINARY)
    assert jnp.allclose(out_bf16, fold_ref_bf16, atol=1e-2, rtol=1e-2), "bf16 kernel mismatch"

    # Config 2: no projections (in == hidden == out), exercises specialized path.
    B2, D2, BIN2 = 16, 64, 2
    x2 = jax.random.normal(k2x, (B2, D2), jnp.float32)
    params2 = _randomize_bn(init_mlp_decoder_params(k2p, D2, D2, D2, BIN2), k2bn)
    kp2 = fold_and_pad_params(params2, jnp.float32)
    out2 = jax.block_until_ready(mlp_decoder_forward(x2, kp2, binary=BIN2))
    assert out2.shape == (B2, BIN2)
    assert jnp.allclose(out2, folded_reference(x2, kp2, BIN2), atol=1e-3, rtol=1e-3), \
        "no-proj f32 kernel mismatch"
    assert jnp.allclose(folded_reference(x2, kp2, BIN2), reference_forward(x2, params2),
                        atol=3e-1, rtol=1e-1), "no-proj BN-fold semantics drift"

    print("KERNEL_OK")
</pallas_src>

<mosaic_0001>
module attributes {stable_mosaic.version = 11 : i64} {
  func.func @_mlp_decoder_kernel(%arg0: i32, %arg1: memref<8x128xf32, #tpu.memory_space<vmem>>, %arg2: memref<128x128xf32, #tpu.memory_space<vmem>>, %arg3: memref<1x128xf32, #tpu.memory_space<vmem>>, %arg4: memref<128x128xf32, #tpu.memory_space<vmem>>, %arg5: memref<1x128xf32, #tpu.memory_space<vmem>>, %arg6: memref<128x128xf32, #tpu.memory_space<vmem>>, %arg7: memref<1x128xf32, #tpu.memory_space<vmem>>, %arg8: memref<128x128xf32, #tpu.memory_space<vmem>>, %arg9: memref<1x128xf32, #tpu.memory_space<vmem>>, %arg10: memref<128x128xf32, #tpu.memory_space<vmem>>, %arg11: memref<1x128xf32, #tpu.memory_space<vmem>>, %arg12: memref<128x128xf32, #tpu.memory_space<vmem>>, %arg13: memref<1x128xf32, #tpu.memory_space<vmem>>, %arg14: memref<8x128xf32, #tpu.memory_space<vmem>>) attributes {dimension_semantics = [#tpu.dimension_semantics<parallel>], iteration_bounds = array<i64: 1>, scalar_prefetch = 0 : i64, scratch_operands = 0 : i64, tpu.core_type = #tpu.core_type<tc>, window_params = [{transform_indices = @transform_0, window_bounds = array<i64: 8, 128>}, {pipeline_mode = #tpu.pipeline_mode<synchronous>, transform_indices = @transform_1, window_bounds = array<i64: 128, 128>}, {pipeline_mode = #tpu.pipeline_mode<synchronous>, transform_indices = @transform_2, window_bounds = array<i64: 1, 128>}, {pipeline_mode = #tpu.pipeline_mode<synchronous>, transform_indices = @transform_3, window_bounds = array<i64: 128, 128>}, {pipeline_mode = #tpu.pipeline_mode<synchronous>, transform_indices = @transform_4, window_bounds = array<i64: 1, 128>}, {pipeline_mode = #tpu.pipeline_mode<synchronous>, transform_indices = @transform_5, window_bounds = array<i64: 128, 128>}, {pipeline_mode = #tpu.pipeline_mode<synchronous>, transform_indices = @transform_6, window_bounds = array<i64: 1, 128>}, {pipeline_mode = #tpu.pipeline_mode<synchronous>, transform_indices = @transform_7, window_bounds = array<i64: 128, 128>}, {pipeline_mode = #tpu.pipeline_mode<synchronous>, transform_indices = @transform_8, window_bounds = array<i64: 1, 128>}, {pipeline_mode = #tpu.pipeline_mode<synchronous>, transform_indices = @transform_9, window_bounds = array<i64: 128, 128>}, {pipeline_mode = #tpu.pipeline_mode<synchronous>, transform_indices = @transform_10, window_bounds = array<i64: 1, 128>}, {pipeline_mode = #tpu.pipeline_mode<synchronous>, transform_indices = @transform_11, window_bounds = array<i64: 128, 128>}, {pipeline_mode = #tpu.pipeline_mode<synchronous>, transform_indices = @transform_12, window_bounds = array<i64: 1, 128>}, {transform_indices = @transform_13, window_bounds = array<i64: 8, 128>}]} {
    %c0 = arith.constant 0 : index
    %c0_0 = arith.constant 0 : index
    %0 = vector.load %arg1[%c0, %c0_0] : memref<8x128xf32, #tpu.memory_space<vmem>>, vector<8x128xf32>
    %c0_1 = arith.constant 0 : index
    %c0_2 = arith.constant 0 : index
    %1 = vector.load %arg2[%c0_1, %c0_2] : memref<128x128xf32, #tpu.memory_space<vmem>>, vector<128x128xf32>
    %cst = arith.constant dense<0.000000e+00> : vector<8x128xf32>
    %2 = tpu.matmul %0, %1, %cst {dimension_numbers = #tpu.dot_dimension_numbers<[1], [0], [0], [1], [0, 0, 1, 1], [], []>} : vector<8x128xf32>, vector<128x128xf32>, vector<8x128xf32> -> vector<8x128xf32>
    %c0_3 = arith.constant 0 : index
    %c0_4 = arith.constant 0 : index
    %3 = vector.load %arg3[%c0_3, %c0_4] : memref<1x128xf32, #tpu.memory_space<vmem>>, vector<1x128xf32>
    %4 = vector.broadcast %3 : vector<1x128xf32> to vector<8x128xf32>
    %5 = arith.addf %2, %4 : vector<8x128xf32>
    %cst_5 = arith.constant 0.000000e+00 : f32
    %6 = vector.broadcast %cst_5 : f32 to vector<8x128xf32>
    %7 = arith.cmpf oge, %5, %6 : vector<8x128xf32>
    %cst_6 = arith.constant 1.000000e-01 : f32
    %8 = vector.broadcast %cst_6 : f32 to vector<8x128xf32>
    %9 = arith.mulf %8, %5 : vector<8x128xf32>
    %10 = arith.select %7, %5, %9 : vector<8x128xi1>, vector<8x128xf32>
    %c0_7 = arith.constant 0 : index
    %c0_8 = arith.constant 0 : index
    %11 = vector.load %arg4[%c0_7, %c0_8] : memref<128x128xf32, #tpu.memory_space<vmem>>, vector<128x128xf32>
    %cst_9 = arith.constant dense<0.000000e+00> : vector<8x128xf32>
    %12 = tpu.matmul %0, %11, %cst_9 {dimension_numbers = #tpu.dot_dimension_numbers<[1], [0], [0], [1], [0, 0, 1, 1], [], []>} : vector<8x128xf32>, vector<128x128xf32>, vector<8x128xf32> -> vector<8x128xf32>
    %c0_10 = arith.constant 0 : index
    %c0_11 = arith.constant 0 : index
    %13 = vector.load %arg5[%c0_10, %c0_11] : memref<1x128xf32, #tpu.memory_space<vmem>>, vector<1x128xf32>
    %14 = vector.broadcast %13 : vector<1x128xf32> to vector<8x128xf32>
    %15 = arith.addf %12, %14 : vector<8x128xf32>
    %cst_12 = arith.constant 1.000000e-01 : f32
    %16 = vector.broadcast %cst_12 : f32 to vector<8x128xf32>
    %17 = arith.mulf %16, %15 : vector<8x128xf32>
    %18 = arith.addf %10, %17 : vector<8x128xf32>
    %c0_13 = arith.constant 0 : index
    %c0_14 = arith.constant 0 : index
    %19 = vector.load %arg6[%c0_13, %c0_14] : memref<128x128xf32, #tpu.memory_space<vmem>>, vector<128x128xf32>
    %cst_15 = arith.constant dense<0.000000e+00> : vector<8x128xf32>
    %20 = tpu.matmul %18, %19, %cst_15 {dimension_numbers = #tpu.dot_dimension_numbers<[1], [0], [0], [1], [0, 0, 1, 1], [], []>} : vector<8x128xf32>, vector<128x128xf32>, vector<8x128xf32> -> vector<8x128xf32>
    %c0_16 = arith.constant 0 : index
    %c0_17 = arith.constant 0 : index
    %21 = vector.load %arg7[%c0_16, %c0_17] : memref<1x128xf32, #tpu.memory_space<vmem>>, vector<1x128xf32>
    %22 = vector.broadcast %21 : vector<1x128xf32> to vector<8x128xf32>
    %23 = arith.addf %20, %22 : vector<8x128xf32>
    %cst_18 = arith.constant 0.000000e+00 : f32
    %24 = vector.broadcast %cst_18 : f32 to vector<8x128xf32>
    %25 = arith.cmpf oge, %23, %24 : vector<8x128xf32>
    %cst_19 = arith.constant 1.000000e-01 : f32
    %26 = vector.broadcast %cst_19 : f32 to vector<8x128xf32>
    %27 = arith.mulf %26, %23 : vector<8x128xf32>
    %28 = arith.select %25, %23, %27 : vector<8x128xi1>, vector<8x128xf32>
    %cst_20 = arith.constant 1.000000e-01 : f32
    %29 = vector.broadcast %cst_20 : f32 to vector<8x128xf32>
    %30 = arith.mulf %29, %18 : vector<8x128xf32>
    %31 = arith.addf %28, %30 : vector<8x128xf32>
    %c0_21 = arith.constant 0 : index
    %c0_22 = arith.constant 0 : index
    %32 = vector.load %arg8[%c0_21, %c0_22] : memref<128x128xf32, #tpu.memory_space<vmem>>, vector<128x128xf32>
    %cst_23 = arith.constant dense<0.000000e+00> : vector<8x128xf32>
    %33 = tpu.matmul %31, %32, %cst_23 {dimension_numbers = #tpu.dot_dimension_numbers<[1], [0], [0], [1], [0, 0, 1, 1], [], []>} : vector<8x128xf32>, vector<128x128xf32>, vector<8x128xf32> -> vector<8x128xf32>
    %c0_24 = arith.constant 0 : index
    %c0_25 = arith.constant 0 : index
    %34 = vector.load %arg9[%c0_24, %c0_25] : memref<1x128xf32, #tpu.memory_space<vmem>>, vector<1x128xf32>
    %35 = vector.broadcast %34 : vector<1x128xf32> to vector<8x128xf32>
    %36 = arith.addf %33, %35 : vector<8x128xf32>
    %cst_26 = arith.constant 0.000000e+00 : f32
    %37 = vector.broadcast %cst_26 : f32 to vector<8x128xf32>
    %38 = arith.cmpf oge, %36, %37 : vector<8x128xf32>
    %cst_27 = arith.constant 1.000000e-01 : f32
    %39 = vector.broadcast %cst_27 : f32 to vector<8x128xf32>
    %40 = arith.mulf %39, %36 : vector<8x128xf32>
    %41 = arith.select %38, %36, %40 : vector<8x128xi1>, vector<8x128xf32>
    %c0_28 = arith.constant 0 : index
    %c0_29 = arith.constant 0 : index
    %42 = vector.load %arg10[%c0_28, %c0_29] : memref<128x128xf32, #tpu.memory_space<vmem>>, vector<128x128xf32>
    %cst_30 = arith.constant dense<0.000000e+00> : vector<8x128xf32>
    %43 = tpu.matmul %31, %42, %cst_30 {dimension_numbers = #tpu.dot_dimension_numbers<[1], [0], [0], [1], [0, 0, 1, 1], [], []>} : vector<8x128xf32>, vector<128x128xf32>, vector<8x128xf32> -> vector<8x128xf32>
    %c0_31 = arith.constant 0 : index
    %c0_32 = arith.constant 0 : index
    %44 = vector.load %arg11[%c0_31, %c0_32] : memref<1x128xf32, #tpu.memory_space<vmem>>, vector<1x128xf32>
    %45 = vector.broadcast %44 : vector<1x128xf32> to vector<8x128xf32>
    %46 = arith.addf %43, %45 : vector<8x128xf32>
    %cst_33 = arith.constant 1.000000e-01 : f32
    %47 = vector.broadcast %cst_33 : f32 to vector<8x128xf32>
    %48 = arith.mulf %47, %46 : vector<8x128xf32>
    %49 = arith.addf %41, %48 : vector<8x128xf32>
    %c0_34 = arith.constant 0 : index
    %c0_35 = arith.constant 0 : index
    %50 = vector.load %arg12[%c0_34, %c0_35] : memref<128x128xf32, #tpu.memory_space<vmem>>, vector<128x128xf32>
    %cst_36 = arith.constant dense<0.000000e+00> : vector<8x128xf32>
    %51 = tpu.matmul %49, %50, %cst_36 {dimension_numbers = #tpu.dot_dimension_numbers<[1], [0], [0], [1], [0, 0, 1, 1], [], []>} : vector<8x128xf32>, vector<128x128xf32>, vector<8x128xf32> -> vector<8x128xf32>
    %c0_37 = arith.constant 0 : index
    %c0_38 = arith.constant 0 : index
    %52 = vector.load %arg13[%c0_37, %c0_38] : memref<1x128xf32, #tpu.memory_space<vmem>>, vector<1x128xf32>
    %53 = vector.broadcast %52 : vector<1x128xf32> to vector<8x128xf32>
    %54 = arith.addf %51, %53 : vector<8x128xf32>
    %c0_39 = arith.constant 0 : index
    %c0_40 = arith.constant 0 : index
    %55 = vector.load %arg14[%c0_39, %c0_40] : memref<8x128xf32, #tpu.memory_space<vmem>>, vector<8x128xf32>
    tpu.vector_store %arg14[%c0_39, %c0_40], %54 {strides = array<i32>} : memref<8x128xf32, #tpu.memory_space<vmem>>, vector<8x128xf32>,
    return
  }
  func.func @transform_0(%arg0: i32) -> (i32, i32) {
    %c0_i32 = arith.constant 0 : i32
    %c0_i32_0 = arith.constant 0 : i32
    return %arg0, %c0_i32 : i32, i32
  }
  func.func @transform_1(%arg0: i32) -> (i32, i32) {
    %c0_i32 = arith.constant 0 : i32
    %c0_i32_0 = arith.constant 0 : i32
    %c0_i32_1 = arith.constant 0 : i32
    return %c0_i32, %c0_i32_0 : i32, i32
  }
  func.func @transform_2(%arg0: i32) -> (i32, i32) {
    %c0_i32 = arith.constant 0 : i32
    %c0_i32_0 = arith.constant 0 : i32
    %c0_i32_1 = arith.constant 0 : i32
    return %c0_i32, %c0_i32_0 : i32, i32
  }
  func.func @transform_3(%arg0: i32) -> (i32, i32) {
    %c0_i32 = arith.constant 0 : i32
    %c0_i32_0 = arith.constant 0 : i32
    %c0_i32_1 = arith.constant 0 : i32
    return %c0_i32, %c0_i32_0 : i32, i32
  }
  func.func @transform_4(%arg0: i32) -> (i32, i32) {
    %c0_i32 = arith.constant 0 : i32
    %c0_i32_0 = arith.constant 0 : i32
    %c0_i32_1 = arith.constant 0 : i32
    return %c0_i32, %c0_i32_0 : i32, i32
  }
  func.func @transform_5(%arg0: i32) -> (i32, i32) {
    %c0_i32 = arith.constant 0 : i32
    %c0_i32_0 = arith.constant 0 : i32
    %c0_i32_1 = arith.constant 0 : i32
    return %c0_i32, %c0_i32_0 : i32, i32
  }
  func.func @transform_6(%arg0: i32) -> (i32, i32) {
    %c0_i32 = arith.constant 0 : i32
    %c0_i32_0 = arith.constant 0 : i32
    %c0_i32_1 = arith.constant 0 : i32
    return %c0_i32, %c0_i32_0 : i32, i32
  }
  func.func @transform_7(%arg0: i32) -> (i32, i32) {
    %c0_i32 = arith.constant 0 : i32
    %c0_i32_0 = arith.constant 0 : i32
    %c0_i32_1 = arith.constant 0 : i32
    return %c0_i32, %c0_i32_0 : i32, i32
  }
  func.func @transform_8(%arg0: i32) -> (i32, i32) {
    %c0_i32 = arith.constant 0 : i32
    %c0_i32_0 = arith.constant 0 : i32
    %c0_i32_1 = arith.constant 0 : i32
    return %c0_i32, %c0_i32_0 : i32, i32
  }
  func.func @transform_9(%arg0: i32) -> (i32, i32) {
    %c0_i32 = arith.constant 0 : i32
    %c0_i32_0 = arith.constant 0 : i32
    %c0_i32_1 = arith.constant 0 : i32
    return %c0_i32, %c0_i32_0 : i32, i32
  }
  func.func @transform_10(%arg0: i32) -> (i32, i32) {
    %c0_i32 = arith.constant 0 : i32
    %c0_i32_0 = arith.constant 0 : i32
    %c0_i32_1 = arith.constant 0 : i32
    return %c0_i32, %c0_i32_0 : i32, i32
  }
  func.func @transform_11(%arg0: i32) -> (i32, i32) {
    %c0_i32 = arith.constant 0 : i32
    %c0_i32_0 = arith.constant 0 : i32
    %c0_i32_1 = arith.constant 0 : i32
    return %c0_i32, %c0_i32_0 : i32, i32
  }
  func.func @transform_12(%arg0: i32) -> (i32, i32) {
    %c0_i32 = arith.constant 0 : i32
    %c0_i32_0 = arith.constant 0 : i32
    %c0_i32_1 = arith.constant 0 : i32
    return %c0_i32, %c0_i32_0 : i32, i32
  }
  func.func @transform_13(%arg0: i32) -> (i32, i32) {
    %c0_i32 = arith.constant 0 : i32
    %c0_i32_0 = arith.constant 0 : i32
    return %arg0, %c0_i32 : i32, i32
  }
}

</mosaic_0001>

<llo_original>
// kernel: mlp_decoder_forward.1
$region0: #{mlp_decoder_forward.1}
  #allocation0 [shape = 'u32[]', space=smem, size = 0x4, offset = 0x4, fixed_abs, tag = 'smem constant byte address 0x4 - core index']
  #allocation1 [shape = 'u32[144,128]{1,0:T(1,128)}', space=vmem, size = 0x12000, scoped, tag = 'internal scratch']
  %s0 = inlined_call_operand.vmem [shape: f32[8,128], index: 0, kind: input, shape index: {}]
  %s1 = inlined_call_operand.hbm [shape: f32[128,128], index: 1, kind: input, shape index: {}]
  %s2 = inlined_call_operand.vmem [shape: f32[1,128], index: 2, kind: input, shape index: {}]
  %s3 = inlined_call_operand.hbm [shape: f32[128,128], index: 3, kind: input, shape index: {}]
  %s4 = inlined_call_operand.vmem [shape: f32[1,128], index: 4, kind: input, shape index: {}]
  %s5 = inlined_call_operand.hbm [shape: f32[128,128], index: 5, kind: input, shape index: {}]
  %s6 = inlined_call_operand.vmem [shape: f32[1,128], index: 6, kind: input, shape index: {}]
  %s7 = inlined_call_operand.hbm [shape: f32[128,128], index: 7, kind: input, shape index: {}]
  %s8 = inlined_call_operand.vmem [shape: f32[1,128], index: 8, kind: input, shape index: {}]
  %s9 = inlined_call_operand.hbm [shape: f32[128,128], index: 9, kind: input, shape index: {}]
  %s10 = inlined_call_operand.vmem [shape: f32[1,128], index: 10, kind: input, shape index: {}]
  %s11 = inlined_call_operand.hbm [shape: f32[128,128], index: 11, kind: input, shape index: {}]
  %s12 = inlined_call_operand.vmem [shape: f32[1,128], index: 12, kind: input, shape index: {}]
  %s13 = inlined_call_operand.vmem [shape: f32[8,128], index: 13, kind: output, shape index: {}]
  %s14 = sld [smem:[#allocation0]]
  $region86: #{mlp_decoder_forward.1} parent=0
    _
  %s16 = ssub.s32 1, %s14
  %s17 = scalar_select 0, %s16, %s14
  $region1: #{mlp_decoder_forward.1} parent=0
    #allocation2 [shape = 'u8[65536]{0}', space=vmem, size = 0x10000, scoped, tag = 'input window, operand 1, single buffered']
    #allocation3 [shape = 's32[1]{0}', space=sflag, size = 0x4, scoped, tag = 'scoped memory for mlp_decoder_forward.1']
    #allocation4 [shape = 'u8[65536]{0}', space=vmem, size = 0x10000, scoped, tag = 'input window, operand 3, single buffered']
    #allocation5 [shape = 's32[1]{0}', space=sflag, size = 0x4, scoped, tag = 'scoped memory for mlp_decoder_forward.1']
    #allocation6 [shape = 'u8[65536]{0}', space=vmem, size = 0x10000, scoped, tag = 'input window, operand 5, single buffered']
    #allocation7 [shape = 'u8[65536]{0}', space=vmem, size = 0x10000, scoped, tag = 'input window, operand 7, single buffered']
    #allocation8 [shape = 's32[1]{0}', space=sflag, size = 0x4, scoped, tag = 'scoped memory for mlp_decoder_forward.1']
    #allocation9 [shape = 'u8[65536]{0}', space=vmem, size = 0x10000, scoped, tag = 'input window, operand 9, single buffered']
    #allocation10 [shape = 'u8[65536]{0}', space=vmem, size = 0x10000, scoped, tag = 'input window, operand 11, single buffered']
    #allocation11 [shape = 's32[1]{0}', space=sflag, size = 0x4, scoped, tag = 'scoped memory for mlp_decoder_forward.1']
    %18 = vsyncpa [#allocation3], 0
    %19 = vsyncpa [#allocation5], 0
    %20 = vsyncpa [#allocation8], 0
    %21 = vsyncpa [#allocation11], 0
    // Predicated region
    $region2: #{mlp_decoder_forward.1} parent=1 // pred_check
      _
    $region3: #{mlp_decoder_forward.1} parent=1 // pred_check_branch
      %23 = sbr.rel (0) target = $region5
    $region4: #{mlp_decoder_forward.1} parent=1 // pred_region
      _
    $region5: #{mlp_decoder_forward.1} parent=1 // pred_fallthru
      _
    // Predicated region
    $region6: #{mlp_decoder_forward.1} parent=1 // pred_check
      _
    $region7: #{mlp_decoder_forward.1} parent=1 // pred_check_branch
      %25 = sbr.rel (0) target = $region9
    $region8: #{mlp_decoder_forward.1} parent=1 // pred_region
      %s27 = ssub.s32 2048, 2048
      %28 = vsyncadd [#allocation3], %s27
      %s29 = sshll.u32 [#allocation2], 4
      %s30 = int_to_ptr.vmem [resolvable:$true] %s29
      %35 = dma.hbm_to_vmem [thread:$0]  %s1, 2048, %s30, [#allocation3], 128, 128, 8
    $region9: #{mlp_decoder_forward.1} parent=1 // pred_fallthru
      _
    // Predicated region
    $region10: #{mlp_decoder_forward.1} parent=1 // pred_check
      _
    $region11: #{mlp_decoder_forward.1} parent=1 // pred_check_branch
      %37 = sbr.rel (0) target = $region13
    $region12: #{mlp_decoder_forward.1} parent=1 // pred_region
      _
    $region13: #{mlp_decoder_forward.1} parent=1 // pred_fallthru
      _
    // Predicated region
    $region14: #{mlp_decoder_forward.1} parent=1 // pred_check
      _
    $region15: #{mlp_decoder_forward.1} parent=1 // pred_check_branch
      %39 = sbr.rel (0) target = $region17
    $region16: #{mlp_decoder_forward.1} parent=1 // pred_region
      %s41 = ssub.s32 2048, 2048
      %42 = vsyncadd [#allocation5], %s41
      %s43 = sshll.u32 [#allocation4], 4
      %s44 = int_to_ptr.vmem [resolvable:$true] %s43
      %49 = dma.hbm_to_vmem [thread:$0]  %s3, 2048, %s44, [#allocation5], 128, 128, 8
    $region17: #{mlp_decoder_forward.1} parent=1 // pred_fallthru
      _
    // Predicated region
    $region18: #{mlp_decoder_forward.1} parent=1 // pred_check
      _
    $region19: #{mlp_decoder_forward.1} parent=1 // pred_check_branch
      %51 = sbr.rel (0) target = $region21
    $region20: #{mlp_decoder_forward.1} parent=1 // pred_region
      _
    $region21: #{mlp_decoder_forward.1} parent=1 // pred_fallthru
      _
    // Predicated region
    $region22: #{mlp_decoder_forward.1} parent=1 // pred_check
      _
    $region23: #{mlp_decoder_forward.1} parent=1 // pred_check_branch
      %53 = sbr.rel (0) target = $region25
    $region24: #{mlp_decoder_forward.1} parent=1 // pred_region
      %s55 = ssub.s32 2048, 2048
      %56 = vsyncadd [#allocation5], %s55
      %s57 = sshll.u32 [#allocation6], 4
      %s58 = int_to_ptr.vmem [resolvable:$true] %s57
      %63 = dma.hbm_to_vmem [thread:$0]  %s5, 2048, %s58, [#allocation5], 128, 128, 8
    $region25: #{mlp_decoder_forward.1} parent=1 // pred_fallthru
      _
    // Predicated region
    $region26: #{mlp_decoder_forward.1} parent=1 // pred_check
      _
    $region27: #{mlp_decoder_forward.1} parent=1 // pred_check_branch
      %65 = sbr.rel (0) target = $region29
    $region28: #{mlp_decoder_forward.1} parent=1 // pred_region
      _
    $region29: #{mlp_decoder_forward.1} parent=1 // pred_fallthru
      _
    // Predicated region
    $region30: #{mlp_decoder_forward.1} parent=1 // pred_check
      _
    $region31: #{mlp_decoder_forward.1} parent=1 // pred_check_branch
      %67 = sbr.rel (0) target = $region33
    $region32: #{mlp_decoder_forward.1} parent=1 // pred_region
      %s69 = ssub.s32 2048, 2048
      %70 = vsyncadd [#allocation8], %s69
      %s71 = sshll.u32 [#allocation7], 4
      %s72 = int_to_ptr.vmem [resolvable:$true] %s71
      %77 = dma.hbm_to_vmem [thread:$0]  %s7, 2048, %s72, [#allocation8], 128, 128, 8
    $region33: #{mlp_decoder_forward.1} parent=1 // pred_fallthru
      _
    // Predicated region
    $region34: #{mlp_decoder_forward.1} parent=1 // pred_check
      _
    $region35: #{mlp_decoder_forward.1} parent=1 // pred_check_branch
      %79 = sbr.rel (0) target = $region37
    $region36: #{mlp_decoder_forward.1} parent=1 // pred_region
      _
    $region37: #{mlp_decoder_forward.1} parent=1 // pred_fallthru
      _
    // Predicated region
    $region38: #{mlp_decoder_forward.1} parent=1 // pred_check
      _
    $region39: #{mlp_decoder_forward.1} parent=1 // pred_check_branch
      %81 = sbr.rel (0) target = $region41
    $region40: #{mlp_decoder_forward.1} parent=1 // pred_region
      %s83 = ssub.s32 2048, 2048
      %84 = vsyncadd [#allocation8], %s83
      %s85 = sshll.u32 [#allocation9], 4
      %s86 = int_to_ptr.vmem [resolvable:$true] %s85
      %91 = dma.hbm_to_vmem [thread:$0]  %s9, 2048, %s86, [#allocation8], 128, 128, 8
    $region41: #{mlp_decoder_forward.1} parent=1 // pred_fallthru
      _
    // Predicated region
    $region42: #{mlp_decoder_forward.1} parent=1 // pred_check
      _
    $region43: #{mlp_decoder_forward.1} parent=1 // pred_check_branch
      %93 = sbr.rel (0) target = $region45
    $region44: #{mlp_decoder_forward.1} parent=1 // pred_region
      _
    $region45: #{mlp_decoder_forward.1} parent=1 // pred_fallthru
      _
    // Predicated region
    $region46: #{mlp_decoder_forward.1} parent=1 // pred_check
      _
    $region47: #{mlp_decoder_forward.1} parent=1 // pred_check_branch
      %95 = sbr.rel (0) target = $region49
    $region48: #{mlp_decoder_forward.1} parent=1 // pred_region
      %s97 = ssub.s32 2048, 2048
      %98 = vsyncadd [#allocation11], %s97
      %s99 = sshll.u32 [#allocation10], 4
      %s100 = int_to_ptr.vmem [resolvable:$true] %s99
      %105 = dma.hbm_to_vmem [thread:$0]  %s11, 2048, %s100, [#allocation11], 128, 128, 8
    $region49: #{mlp_decoder_forward.1} parent=1 // pred_fallthru
      _
    // Predicated region
    $region50: #{mlp_decoder_forward.1} parent=1 // pred_check
      _
    $region51: #{mlp_decoder_forward.1} parent=1 // pred_check_branch
      %107 = sbr.rel (0) target = $region53
    $region52: #{mlp_decoder_forward.1} parent=1 // pred_region
      _
    $region53: #{mlp_decoder_forward.1} parent=1 // pred_fallthru
      _
    // Predicated region
    $region54: #{mlp_decoder_forward.1} parent=1 // pred_check
      _
    $region55: #{mlp_decoder_forward.1} parent=1 // pred_check_branch
      %109 = sbr.rel (0) target = $region57
    $region56: #{mlp_decoder_forward.1} parent=1 // pred_region
      %110 = dma.done [#allocation3], 2048
    $region57: #{mlp_decoder_forward.1} parent=1 // pred_fallthru
      _
    // Predicated region
    $region58: #{mlp_decoder_forward.1} parent=1 // pred_check
      _
    $region59: #{mlp_decoder_forward.1} parent=1 // pred_check_branch
      %112 = sbr.rel (0) target = $region61
    $region60: #{mlp_decoder_forward.1} parent=1 // pred_region
      %113 = dma.done [#allocation5], 2048
    $region61: #{mlp_decoder_forward.1} parent=1 // pred_fallthru
      _
    // Predicated region
    $region62: #{mlp_decoder_forward.1} parent=1 // pred_check
      _
    $region63: #{mlp_decoder_forward.1} parent=1 // pred_check_branch
      %115 = sbr.rel (0) target = $region65
    $region64: #{mlp_decoder_forward.1} parent=1 // pred_region
      %116 = dma.done [#allocation5], 2048
    $region65: #{mlp_decoder_forward.1} parent=1 // pred_fallthru
      _
    // Predicated region
    $region66: #{mlp_decoder_forward.1} parent=1 // pred_check
      _
    $region67: #{mlp_decoder_forward.1} parent=1 // pred_check_branch
      %118 = sbr.rel (0) target = $region69
    $region68: #{mlp_decoder_forward.1} parent=1 // pred_region
      %119 = dma.done [#allocation8], 2048
    $region69: #{mlp_decoder_forward.1} parent=1 // pred_fallthru
      _
    // Predicated region
    $region70: #{mlp_decoder_forward.1} parent=1 // pred_check
      _
    $region71: #{mlp_decoder_forward.1} parent=1 // pred_check_branch
      %121 = sbr.rel (0) target = $region73
    $region72: #{mlp_decoder_forward.1} parent=1 // pred_region
      %122 = dma.done [#allocation8], 2048
    $region73: #{mlp_decoder_forward.1} parent=1 // pred_fallthru
      _
    // Predicated region
    $region74: #{mlp_decoder_forward.1} parent=1 // pred_check
      _
    $region75: #{mlp_decoder_forward.1} parent=1 // pred_check_branch
      %124 = sbr.rel (0) target = $region77
    $region76: #{mlp_decoder_forward.1} parent=1 // pred_region
      %125 = dma.done [#allocation11], 2048
    $region77: #{mlp_decoder_forward.1} parent=1 // pred_fallthru
      _
    %v126 = vld [vmem:[%s0] sm:$0xff]
    %v127 = vld [vmem:[#allocation2] sm:$0xff]
    %v128 = vld [vmem:[#allocation2 + $0x8] sm:$0xff]
    %v129 = vld [vmem:[#allocation2 + $0x10] sm:$0xff]
    %v130 = vld [vmem:[#allocation2 + $0x18] sm:$0xff]
    %v131 = vld [vmem:[#allocation2 + $0x20] sm:$0xff]
    %v132 = vld [vmem:[#allocation2 + $0x28] sm:$0xff]
    %v133 = vld [vmem:[#allocation2 + $0x30] sm:$0xff]
    %v134 = vld [vmem:[#allocation2 + $0x38] sm:$0xff]
    %v135 = vld [vmem:[#allocation2 + $0x40] sm:$0xff]
    %v136 = vld [vmem:[#allocation2 + $0x48] sm:$0xff]
    %v137 = vld [vmem:[#allocation2 + $0x50] sm:$0xff]
    %v138 = vld [vmem:[#allocation2 + $0x58] sm:$0xff]
    %v139 = vld [vmem:[#allocation2 + $0x60] sm:$0xff]
    %v140 = vld [vmem:[#allocation2 + $0x68] sm:$0xff]
    %v141 = vld [vmem:[#allocation2 + $0x70] sm:$0xff]
    %v142 = vld [vmem:[#allocation2 + $0x78] sm:$0xff]
    %v143 = vld [vmem:[%s2] sm:$0x1]
    %v145 = vlaneseq
    %v146 = vshrl.u32 %v145, 7
    %v147 = vsub.s32 0, %v146
    %v148 = vrot.slane %v143, %v147
    %150 = vmatprep.subr.mxu0 0.0
    %151 = vmatpush1.msra.mxu0 %v142
    %152 = vmatprep.subr.mxu0 0.0
    %153 = vmatpush1.msra.mxu0 %v141
    %154 = vmatprep.subr.mxu0 0.0
    %155 = vmatpush1.msra.mxu0 %v140
    %156 = vmatprep.subr.mxu0 0.0
    %157 = vmatpush1.msra.mxu0 %v139
    %158 = vmatprep.subr.mxu0 0.0
    %159 = vmatpush1.msra.mxu0 %v138
    %160 = vmatprep.subr.mxu0 0.0
    %161 = vmatpush1.msra.mxu0 %v137
    %162 = vmatprep.subr.mxu0 0.0
    %163 = vmatpush1.msra.mxu0 %v136
    %164 = vmatprep.subr.mxu0 0.0
    %165 = vmatpush1.msra.mxu0 %v135
    %166 = vmatprep.subr.mxu0 0.0
    %167 = vmatpush1.msra.mxu0 %v134
    %168 = vmatprep.subr.mxu0 0.0
    %169 = vmatpush1.msra.mxu0 %v133
    %170 = vmatprep.subr.mxu0 0.0
    %171 = vmatpush1.msra.mxu0 %v132
    %172 = vmatprep.subr.mxu0 0.0
    %173 = vmatpush1.msra.mxu0 %v131
    %174 = vmatprep.subr.mxu0 0.0
    %175 = vmatpush1.msra.mxu0 %v130
    %176 = vmatprep.subr.mxu0 0.0
    %177 = vmatpush1.msra.mxu0 %v129
    %178 = vmatprep.subr.mxu0 0.0
    %179 = vmatpush1.msra.mxu0 %v128
    %180 = vmatprep.subr.mxu0 0.0
    %181 = vmatpush1.msra.mxu0 %v127
    %182 = vmatprep.subr.mxu0 0.0
    %183 = vmatpush2.msra.mxu0 0.0
    %184 = vmatprep.subr.mxu0 0.0
    %185 = vmatpush2.msra.mxu0 0.0
    %186 = vmatprep.subr.mxu0 0.0
    %187 = vmatpush2.msra.mxu0 0.0
    %188 = vmatprep.subr.mxu0 0.0
    %189 = vmatpush2.msra.mxu0 0.0
    %190 = vmatprep.subr.mxu0 0.0
    %191 = vmatpush2.msra.mxu0 0.0
    %192 = vmatprep.subr.mxu0 0.0
    %193 = vmatpush2.msra.mxu0 0.0
    %194 = vmatprep.subr.mxu0 0.0
    %195 = vmatpush2.msra.mxu0 0.0
    %196 = vmatprep.subr.mxu0 0.0
    %197 = vmatpush2.msra.mxu0 0.0
    %198 = vmatprep.subr.mxu0 0.0
    %199 = vmatpush2.msra.mxu0 0.0
    %200 = vmatprep.subr.mxu0 0.0
    %201 = vmatpush2.msra.mxu0 0.0
    %202 = vmatprep.subr.mxu0 0.0
    %203 = vmatpush2.msra.mxu0 0.0
    %204 = vmatprep.subr.mxu0 0.0
    %205 = vmatpush2.msra.mxu0 0.0
    %206 = vmatprep.subr.mxu0 0.0
    %207 = vmatpush2.msra.mxu0 0.0
    %208 = vmatprep.subr.mxu0 0.0
    %209 = vmatpush2.msra.mxu0 0.0
    %210 = vmatprep.subr.mxu0 0.0
    %211 = vmatpush2.msra.mxu0 0.0
    %212 = vmatprep.subr.mxu0 0.0
    %213 = vmatpush2.msra.mxu0 0.0
    %214 = vmatprep.mubr.f32.mxu0 0.0
    %215 = vmatmul.mubr.f32.gmra.mxu0 %v126
    %v216 = vpop.f32.mrf.mxu0
    %v217 = vadd.f32 %v148, %v216
    %v218 = vpop.f32.mrf.mxu0
    %219 = vdwg.mxu0
    %vm220 = vcmp.ge.f32.partialorder %v217, 0.0
    %v221 = vmul.f32 %v217, 0.1
    %v222 = vsel %vm220, %v217, %v221
    %v223 = vld [vmem:[#allocation4] sm:$0xff]
    %v224 = vld [vmem:[#allocation4 + $0x8] sm:$0xff]
    %v225 = vld [vmem:[#allocation4 + $0x10] sm:$0xff]
    %v226 = vld [vmem:[#allocation4 + $0x18] sm:$0xff]
    %v227 = vld [vmem:[#allocation4 + $0x20] sm:$0xff]
    %v228 = vld [vmem:[#allocation4 + $0x28] sm:$0xff]
    %v229 = vld [vmem:[#allocation4 + $0x30] sm:$0xff]
    %v230 = vld [vmem:[#allocation4 + $0x38] sm:$0xff]
    %v231 = vld [vmem:[#allocation4 + $0x40] sm:$0xff]
    %v232 = vld [vmem:[#allocation4 + $0x48] sm:$0xff]
    %v233 = vld [vmem:[#allocation4 + $0x50] sm:$0xff]
    %v234 = vld [vmem:[#allocation4 + $0x58] sm:$0xff]
    %v235 = vld [vmem:[#allocation4 + $0x60] sm:$0xff]
    %v236 = vld [vmem:[#allocation4 + $0x68] sm:$0xff]
    %v237 = vld [vmem:[#allocation4 + $0x70] sm:$0xff]
    %v238 = vld [vmem:[#allocation4 + $0x78] sm:$0xff]
    %v239 = vld [vmem:[%s4] sm:$0x1]
    %v241 = vlaneseq
    %v242 = vshrl.u32 %v241, 7
    %v243 = vsub.s32 0, %v242
    %v244 = vrot.slane %v239, %v243
    %246 = vmatprep.subr.mxu0 0.0
    %247 = vmatpush1.msra.mxu0 %v238
    %248 = vmatprep.subr.mxu0 0.0
    %249 = vmatpush1.msra.mxu0 %v237
    %250 = vmatprep.subr.mxu0 0.0
    %251 = vmatpush1.msra.mxu0 %v236
    %252 = vmatprep.subr.mxu0 0.0
    %253 = vmatpush1.msra.mxu0 %v235
    %254 = vmatprep.subr.mxu0 0.0
    %255 = vmatpush1.msra.mxu0 %v234
    %256 = vmatprep.subr.mxu0 0.0
    %257 = vmatpush1.msra.mxu0 %v233
    %258 = vmatprep.subr.mxu0 0.0
    %259 = vmatpush1.msra.mxu0 %v232
    %260 = vmatprep.subr.mxu0 0.0
    %261 = vmatpush1.msra.mxu0 %v231
    %262 = vmatprep.subr.mxu0 0.0
    %263 = vmatpush1.msra.mxu0 %v230
    %264 = vmatprep.subr.mxu0 0.0
    %265 = vmatpush1.msra.mxu0 %v229
    %266 = vmatprep.subr.mxu0 0.0
    %267 = vmatpush1.msra.mxu0 %v228
    %268 = vmatprep.subr.mxu0 0.0
    %269 = vmatpush1.msra.mxu0 %v227
    %270 = vmatprep.subr.mxu0 0.0
    %271 = vmatpush1.msra.mxu0 %v226
    %272 = vmatprep.subr.mxu0 0.0
    %273 = vmatpush1.msra.mxu0 %v225
    %274 = vmatprep.subr.mxu0 0.0
    %275 = vmatpush1.msra.mxu0 %v224
    %276 = vmatprep.subr.mxu0 0.0
    %277 = vmatpush1.msra.mxu0 %v223
    %278 = vmatprep.subr.mxu0 0.0
    %279 = vmatpush2.msra.mxu0 0.0
    %280 = vmatprep.subr.mxu0 0.0
    %281 = vmatpush2.msra.mxu0 0.0
    %282 = vmatprep.subr.mxu0 0.0
    %283 = vmatpush2.msra.mxu0 0.0
    %284 = vmatprep.subr.mxu0 0.0
    %285 = vmatpush2.msra.mxu0 0.0
    %286 = vmatprep.subr.mxu0 0.0
    %287 = vmatpush2.msra.mxu0 0.0
    %288 = vmatprep.subr.mxu0 0.0
    %289 = vmatpush2.msra.mxu0 0.0
    %290 = vmatprep.subr.mxu0 0.0
    %291 = vmatpush2.msra.mxu0 0.0
    %292 = vmatprep.subr.mxu0 0.0
    %293 = vmatpush2.msra.mxu0 0.0
    %294 = vmatprep.subr.mxu0 0.0
    %295 = vmatpush2.msra.mxu0 0.0
    %296 = vmatprep.subr.mxu0 0.0
    %297 = vmatpush2.msra.mxu0 0.0
    %298 = vmatprep.subr.mxu0 0.0
    %299 = vmatpush2.msra.mxu0 0.0
    %300 = vmatprep.subr.mxu0 0.0
    %301 = vmatpush2.msra.mxu0 0.0
    %302 = vmatprep.subr.mxu0 0.0
    %303 = vmatpush2.msra.mxu0 0.0
    %304 = vmatprep.subr.mxu0 0.0
    %305 = vmatpush2.msra.mxu0 0.0
    %306 = vmatprep.subr.mxu0 0.0
    %307 = vmatpush2.msra.mxu0 0.0
    %308 = vmatprep.subr.mxu0 0.0
    %309 = vmatpush2.msra.mxu0 0.0
    %310 = vmatprep.mubr.f32.mxu0 0.0
    %311 = vmatmul.mubr.f32.gmra.mxu0 %v126
    %v312 = vpop.f32.mrf.mxu0
    %v313 = vadd.f32 %v244, %v312
    %v314 = vpop.f32.mrf.mxu0
    %315 = vdwg.mxu0
    %v316 = vmul.f32 %v313, 0.1
    %v317 = vadd.f32 %v222, %v316
    %v318 = vld [vmem:[#allocation6] sm:$0xff]
    %v319 = vld [vmem:[#allocation6 + $0x8] sm:$0xff]
    %v320 = vld [vmem:[#allocation6 + $0x10] sm:$0xff]
    %v321 = vld [vmem:[#allocation6 + $0x18] sm:$0xff]
    %v322 = vld [vmem:[#allocation6 + $0x20] sm:$0xff]
    %v323 = vld [vmem:[#allocation6 + $0x28] sm:$0xff]
    %v324 = vld [vmem:[#allocation6 + $0x30] sm:$0xff]
    %v325 = vld [vmem:[#allocation6 + $0x38] sm:$0xff]
    %v326 = vld [vmem:[#allocation6 + $0x40] sm:$0xff]
    %v327 = vld [vmem:[#allocation6 + $0x48] sm:$0xff]
    %v328 = vld [vmem:[#allocation6 + $0x50] sm:$0xff]
    %v329 = vld [vmem:[#allocation6 + $0x58] sm:$0xff]
    %v330 = vld [vmem:[#allocation6 + $0x60] sm:$0xff]
    %v331 = vld [vmem:[#allocation6 + $0x68] sm:$0xff]
    %v332 = vld [vmem:[#allocation6 + $0x70] sm:$0xff]
    %v333 = vld [vmem:[#allocation6 + $0x78] sm:$0xff]
    %v334 = vld [vmem:[%s6] sm:$0x1]
    %v336 = vlaneseq
    %v337 = vshrl.u32 %v336, 7
    %v338 = vsub.s32 0, %v337
    %v339 = vrot.slane %v334, %v338
    %341 = vmatprep.subr.mxu0 0.0
    %342 = vmatpush1.msra.mxu0 %v333
    %343 = vmatprep.subr.mxu0 0.0
    %344 = vmatpush1.msra.mxu0 %v332
    %345 = vmatprep.subr.mxu0 0.0
    %346 = vmatpush1.msra.mxu0 %v331
    %347 = vmatprep.subr.mxu0 0.0
    %348 = vmatpush1.msra.mxu0 %v330
    %349 = vmatprep.subr.mxu0 0.0
    %350 = vmatpush1.msra.mxu0 %v329
    %351 = vmatprep.subr.mxu0 0.0
    %352 = vmatpush1.msra.mxu0 %v328
    %353 = vmatprep.subr.mxu0 0.0
    %354 = vmatpush1.msra.mxu0 %v327
    %355 = vmatprep.subr.mxu0 0.0
    %356 = vmatpush1.msra.mxu0 %v326
    %357 = vmatprep.subr.mxu0 0.0
    %358 = vmatpush1.msra.mxu0 %v325
    %359 = vmatprep.subr.mxu0 0.0
    %360 = vmatpush1.msra.mxu0 %v324
    %361 = vmatprep.subr.mxu0 0.0
    %362 = vmatpush1.msra.mxu0 %v323
    %363 = vmatprep.subr.mxu0 0.0
    %364 = vmatpush1.msra.mxu0 %v322
    %365 = vmatprep.subr.mxu0 0.0
    %366 = vmatpush1.msra.mxu0 %v321
    %367 = vmatprep.subr.mxu0 0.0
    %368 = vmatpush1.msra.mxu0 %v320
    %369 = vmatprep.subr.mxu0 0.0
    %370 = vmatpush1.msra.mxu0 %v319
    %371 = vmatprep.subr.mxu0 0.0
    %372 = vmatpush1.msra.mxu0 %v318
    %373 = vmatprep.subr.mxu0 0.0
    %374 = vmatpush2.msra.mxu0 0.0
    %375 = vmatprep.subr.mxu0 0.0
    %376 = vmatpush2.msra.mxu0 0.0
    %377 = vmatprep.subr.mxu0 0.0
    %378 = vmatpush2.msra.mxu0 0.0
    %379 = vmatprep.subr.mxu0 0.0
    %380 = vmatpush2.msra.mxu0 0.0
    %381 = vmatprep.subr.mxu0 0.0
    %382 = vmatpush2.msra.mxu0 0.0
    %383 = vmatprep.subr.mxu0 0.0
    %384 = vmatpush2.msra.mxu0 0.0
    %385 = vmatprep.subr.mxu0 0.0
    %386 = vmatpush2.msra.mxu0 0.0
    %387 = vmatprep.subr.mxu0 0.0
    %388 = vmatpush2.msra.mxu0 0.0
    %389 = vmatprep.subr.mxu0 0.0
    %390 = vmatpush2.msra.mxu0 0.0
    %391 = vmatprep.subr.mxu0 0.0
    %392 = vmatpush2.msra.mxu0 0.0
    %393 = vmatprep.subr.mxu0 0.0
    %394 = vmatpush2.msra.mxu0 0.0
    %395 = vmatprep.subr.mxu0 0.0
    %396 = vmatpush2.msra.mxu0 0.0
    %397 = vmatprep.subr.mxu0 0.0
    %398 = vmatpush2.msra.mxu0 0.0
    %399 = vmatprep.subr.mxu0 0.0
    %400 = vmatpush2.msra.mxu0 0.0
    %401 = vmatprep.subr.mxu0 0.0
    %402 = vmatpush2.msra.mxu0 0.0
    %403 = vmatprep.subr.mxu0 0.0
    %404 = vmatpush2.msra.mxu0 0.0
    %405 = vmatprep.mubr.f32.mxu0 0.0
    %406 = vmatmul.mubr.f32.gmra.mxu0 %v317
    %v407 = vpop.f32.mrf.mxu0
    %v408 = vadd.f32 %v339, %v407
    %v409 = vpop.f32.mrf.mxu0
    %410 = vdwg.mxu0
    %vm411 = vcmp.ge.f32.partialorder %v408, 0.0
    %v412 = vmul.f32 %v408, 0.1
    %v413 = vsel %vm411, %v408, %v412
    %v414 = vmul.f32 %v317, 0.1
    %v415 = vadd.f32 %v413, %v414
    %v416 = vld [vmem:[#allocation7] sm:$0xff]
    %v417 = vld [vmem:[#allocation7 + $0x8] sm:$0xff]
    %v418 = vld [vmem:[#allocation7 + $0x10] sm:$0xff]
    %v419 = vld [vmem:[#allocation7 + $0x18] sm:$0xff]
    %v420 = vld [vmem:[#allocation7 + $0x20] sm:$0xff]
    %v421 = vld [vmem:[#allocation7 + $0x28] sm:$0xff]
    %v422 = vld [vmem:[#allocation7 + $0x30] sm:$0xff]
    %v423 = vld [vmem:[#allocation7 + $0x38] sm:$0xff]
    %v424 = vld [vmem:[#allocation7 + $0x40] sm:$0xff]
    %v425 = vld [vmem:[#allocation7 + $0x48] sm:$0xff]
    %v426 = vld [vmem:[#allocation7 + $0x50] sm:$0xff]
    %v427 = vld [vmem:[#allocation7 + $0x58] sm:$0xff]
    %v428 = vld [vmem:[#allocation7 + $0x60] sm:$0xff]
    %v429 = vld [vmem:[#allocation7 + $0x68] sm:$0xff]
    %v430 = vld [vmem:[#allocation7 + $0x70] sm:$0xff]
    %v431 = vld [vmem:[#allocation7 + $0x78] sm:$0xff]
    %v432 = vld [vmem:[%s8] sm:$0x1]
    %v434 = vlaneseq
    %v435 = vshrl.u32 %v434, 7
    %v436 = vsub.s32 0, %v435
    %v437 = vrot.slane %v432, %v436
    %439 = vmatprep.subr.mxu0 0.0
    %440 = vmatpush1.msra.mxu0 %v431
    %441 = vmatprep.subr.mxu0 0.0
    %442 = vmatpush1.msra.mxu0 %v430
    %443 = vmatprep.subr.mxu0 0.0
    %444 = vmatpush1.msra.mxu0 %v429
    %445 = vmatprep.subr.mxu0 0.0
    %446 = vmatpush1.msra.mxu0 %v428
    %447 = vmatprep.subr.mxu0 0.0
    %448 = vmatpush1.msra.mxu0 %v427
    %449 = vmatprep.subr.mxu0 0.0
    %450 = vmatpush1.msra.mxu0 %v426
    %451 = vmatprep.subr.mxu0 0.0
    %452 = vmatpush1.msra.mxu0 %v425
    %453 = vmatprep.subr.mxu0 0.0
    %454 = vmatpush1.msra.mxu0 %v424
    %455 = vmatprep.subr.mxu0 0.0
    %456 = vmatpush1.msra.mxu0 %v423
    %457 = vmatprep.subr.mxu0 0.0
    %458 = vmatpush1.msra.mxu0 %v422
    %459 = vmatprep.subr.mxu0 0.0
    %460 = vmatpush1.msra.mxu0 %v421
    %461 = vmatprep.subr.mxu0 0.0
    %462 = vmatpush1.msra.mxu0 %v420
    %463 = vmatprep.subr.mxu0 0.0
    %464 = vmatpush1.msra.mxu0 %v419
    %465 = vmatprep.subr.mxu0 0.0
    %466 = vmatpush1.msra.mxu0 %v418
    %467 = vmatprep.subr.mxu0 0.0
    %468 = vmatpush1.msra.mxu0 %v417
    %469 = vmatprep.subr.mxu0 0.0
    %470 = vmatpush1.msra.mxu0 %v416
    %471 = vmatprep.subr.mxu0 0.0
    %472 = vmatpush2.msra.mxu0 0.0
    %473 = vmatprep.subr.mxu0 0.0
    %474 = vmatpush2.msra.mxu0 0.0
    %475 = vmatprep.subr.mxu0 0.0
    %476 = vmatpush2.msra.mxu0 0.0
    %477 = vmatprep.subr.mxu0 0.0
    %478 = vmatpush2.msra.mxu0 0.0
    %479 = vmatprep.subr.mxu0 0.0
    %480 = vmatpush2.msra.mxu0 0.0
    %481 = vmatprep.subr.mxu0 0.0
    %482 = vmatpush2.msra.mxu0 0.0
    %483 = vmatprep.subr.mxu0 0.0
    %484 = vmatpush2.msra.mxu0 0.0
    %485 = vmatprep.subr.mxu0 0.0
    %486 = vmatpush2.msra.mxu0 0.0
    %487 = vmatprep.subr.mxu0 0.0
    %488 = vmatpush2.msra.mxu0 0.0
    %489 = vmatprep.subr.mxu0 0.0
    %490 = vmatpush2.msra.mxu0 0.0
    %491 = vmatprep.subr.mxu0 0.0
    %492 = vmatpush2.msra.mxu0 0.0
    %493 = vmatprep.subr.mxu0 0.0
    %494 = vmatpush2.msra.mxu0 0.0
    %495 = vmatprep.subr.mxu0 0.0
    %496 = vmatpush2.msra.mxu0 0.0
    %497 = vmatprep.subr.mxu0 0.0
    %498 = vmatpush2.msra.mxu0 0.0
    %499 = vmatprep.subr.mxu0 0.0
    %500 = vmatpush2.msra.mxu0 0.0
    %501 = vmatprep.subr.mxu0 0.0
    %502 = vmatpush2.msra.mxu0 0.0
    %503 = vmatprep.mubr.f32.mxu0 0.0
    %504 = vmatmul.mubr.f32.gmra.mxu0 %v415
    %v505 = vpop.f32.mrf.mxu0
    %v506 = vadd.f32 %v437, %v505
    %v507 = vpop.f32.mrf.mxu0
    %508 = vdwg.mxu0
    %vm509 = vcmp.ge.f32.partialorder %v506, 0.0
    %v510 = vmul.f32 %v506, 0.1
    %v511 = vsel %vm509, %v506, %v510
    %v512 = vld [vmem:[#allocation9] sm:$0xff]
    %v513 = vld [vmem:[#allocation9 + $0x8] sm:$0xff]
    %v514 = vld [vmem:[#allocation9 + $0x10] sm:$0xff]
    %v515 = vld [vmem:[#allocation9 + $0x18] sm:$0xff]
    %v516 = vld [vmem:[#allocation9 + $0x20] sm:$0xff]
    %v517 = vld [vmem:[#allocation9 + $0x28] sm:$0xff]
    %v518 = vld [vmem:[#allocation9 + $0x30] sm:$0xff]
    %v519 = vld [vmem:[#allocation9 + $0x38] sm:$0xff]
    %v520 = vld [vmem:[#allocation9 + $0x40] sm:$0xff]
    %v521 = vld [vmem:[#allocation9 + $0x48] sm:$0xff]
    %v522 = vld [vmem:[#allocation9 + $0x50] sm:$0xff]
    %v523 = vld [vmem:[#allocation9 + $0x58] sm:$0xff]
    %v524 = vld [vmem:[#allocation9 + $0x60] sm:$0xff]
    %v525 = vld [vmem:[#allocation9 + $0x68] sm:$0xff]
    %v526 = vld [vmem:[#allocation9 + $0x70] sm:$0xff]
    %v527 = vld [vmem:[#allocation9 + $0x78] sm:$0xff]
    %v528 = vld [vmem:[%s10] sm:$0x1]
    %v530 = vlaneseq
    %v531 = vshrl.u32 %v530, 7
    %v532 = vsub.s32 0, %v531
    %v533 = vrot.slane %v528, %v532
    %535 = vmatprep.subr.mxu0 0.0
    %536 = vmatpush1.msra.mxu0 %v527
    %537 = vmatprep.subr.mxu0 0.0
    %538 = vmatpush1.msra.mxu0 %v526
    %539 = vmatprep.subr.mxu0 0.0
    %540 = vmatpush1.msra.mxu0 %v525
    %541 = vmatprep.subr.mxu0 0.0
    %542 = vmatpush1.msra.mxu0 %v524
    %543 = vmatprep.subr.mxu0 0.0
    %544 = vmatpush1.msra.mxu0 %v523
    %545 = vmatprep.subr.mxu0 0.0
    %546 = vmatpush1.msra.mxu0 %v522
    %547 = vmatprep.subr.mxu0 0.0
    %548 = vmatpush1.msra.mxu0 %v521
    %549 = vmatprep.subr.mxu0 0.0
    %550 = vmatpush1.msra.mxu0 %v520
    %551 = vmatprep.subr.mxu0 0.0
    %552 = vmatpush1.msra.mxu0 %v519
    %553 = vmatprep.subr.mxu0 0.0
    %554 = vmatpush1.msra.mxu0 %v518
    %555 = vmatprep.subr.mxu0 0.0
    %556 = vmatpush1.msra.mxu0 %v517
    %557 = vmatprep.subr.mxu0 0.0
    %558 = vmatpush1.msra.mxu0 %v516
    %559 = vmatprep.subr.mxu0 0.0
    %560 = vmatpush1.msra.mxu0 %v515
    %561 = vmatprep.subr.mxu0 0.0
    %562 = vmatpush1.msra.mxu0 %v514
    %563 = vmatprep.subr.mxu0 0.0
    %564 = vmatpush1.msra.mxu0 %v513
    %565 = vmatprep.subr.mxu0 0.0
    %566 = vmatpush1.msra.mxu0 %v512
    %567 = vmatprep.subr.mxu0 0.0
    %568 = vmatpush2.msra.mxu0 0.0
    %569 = vmatprep.subr.mxu0 0.0
    %570 = vmatpush2.msra.mxu0 0.0
    %571 = vmatprep.subr.mxu0 0.0
    %572 = vmatpush2.msra.mxu0 0.0
    %573 = vmatprep.subr.mxu0 0.0
    %574 = vmatpush2.msra.mxu0 0.0
    %575 = vmatprep.subr.mxu0 0.0
    %576 = vmatpush2.msra.mxu0 0.0
    %577 = vmatprep.subr.mxu0 0.0
    %578 = vmatpush2.msra.mxu0 0.0
    %579 = vmatprep.subr.mxu0 0.0
    %580 = vmatpush2.msra.mxu0 0.0
    %581 = vmatprep.subr.mxu0 0.0
    %582 = vmatpush2.msra.mxu0 0.0
    %583 = vmatprep.subr.mxu0 0.0
    %584 = vmatpush2.msra.mxu0 0.0
    %585 = vmatprep.subr.mxu0 0.0
    %586 = vmatpush2.msra.mxu0 0.0
    %587 = vmatprep.subr.mxu0 0.0
    %588 = vmatpush2.msra.mxu0 0.0
    %589 = vmatprep.subr.mxu0 0.0
    %590 = vmatpush2.msra.mxu0 0.0
    %591 = vmatprep.subr.mxu0 0.0
    %592 = vmatpush2.msra.mxu0 0.0
    %593 = vmatprep.subr.mxu0 0.0
    %594 = vmatpush2.msra.mxu0 0.0
    %595 = vmatprep.subr.mxu0 0.0
    %596 = vmatpush2.msra.mxu0 0.0
    %597 = vmatprep.subr.mxu0 0.0
    %598 = vmatpush2.msra.mxu0 0.0
    %599 = vmatprep.mubr.f32.mxu0 0.0
    %600 = vmatmul.mubr.f32.gmra.mxu0 %v415
    %v601 = vpop.f32.mrf.mxu0
    %v602 = vadd.f32 %v533, %v601
    %v603 = vpop.f32.mrf.mxu0
    %604 = vdwg.mxu0
    %v605 = vmul.f32 %v602, 0.1
    %v606 = vadd.f32 %v511, %v605
    %v607 = vld [vmem:[#allocation10] sm:$0xff]
    %v608 = vld [vmem:[#allocation10 + $0x8] sm:$0xff]
    %v609 = vld [vmem:[#allocation10 + $0x10] sm:$0xff]
    %v610 = vld [vmem:[#allocation10 + $0x18] sm:$0xff]
    %v611 = vld [vmem:[#allocation10 + $0x20] sm:$0xff]
    %v612 = vld [vmem:[#allocation10 + $0x28] sm:$0xff]
    %v613 = vld [vmem:[#allocation10 + $0x30] sm:$0xff]
    %v614 = vld [vmem:[#allocation10 + $0x38] sm:$0xff]
    %v615 = vld [vmem:[#allocation10 + $0x40] sm:$0xff]
    %v616 = vld [vmem:[#allocation10 + $0x48] sm:$0xff]
    %v617 = vld [vmem:[#allocation10 + $0x50] sm:$0xff]
    %v618 = vld [vmem:[#allocation10 + $0x58] sm:$0xff]
    %v619 = vld [vmem:[#allocation10 + $0x60] sm:$0xff]
    %v620 = vld [vmem:[#allocation10 + $0x68] sm:$0xff]
    %v621 = vld [vmem:[#allocation10 + $0x70] sm:$0xff]
    %v622 = vld [vmem:[#allocation10 + $0x78] sm:$0xff]
    %v623 = vld [vmem:[%s12] sm:$0x1]
    %v625 = vlaneseq
    %v626 = vshrl.u32 %v625, 7
    %v627 = vsub.s32 0, %v626
    %v628 = vrot.slane %v623, %v627
    %630 = vmatprep.subr.mxu0 0.0
    %631 = vmatpush1.msra.mxu0 %v622
    %632 = vmatprep.subr.mxu0 0.0
    %633 = vmatpush1.msra.mxu0 %v621
    %634 = vmatprep.subr.mxu0 0.0
    %635 = vmatpush1.msra.mxu0 %v620
    %636 = vmatprep.subr.mxu0 0.0
    %637 = vmatpush1.msra.mxu0 %v619
    %638 = vmatprep.subr.mxu0 0.0
    %639 = vmatpush1.msra.mxu0 %v618
    %640 = vmatprep.subr.mxu0 0.0
    %641 = vmatpush1.msra.mxu0 %v617
    %642 = vmatprep.subr.mxu0 0.0
    %643 = vmatpush1.msra.mxu0 %v616
    %644 = vmatprep.subr.mxu0 0.0
    %645 = vmatpush1.msra.mxu0 %v615
    %646 = vmatprep.subr.mxu0 0.0
    %647 = vmatpush1.msra.mxu0 %v614
    %648 = vmatprep.subr.mxu0 0.0
    %649 = vmatpush1.msra.mxu0 %v613
    %650 = vmatprep.subr.mxu0 0.0
    %651 = vmatpush1.msra.mxu0 %v612
    %652 = vmatprep.subr.mxu0 0.0
    %653 = vmatpush1.msra.mxu0 %v611
    %654 = vmatprep.subr.mxu0 0.0
    %655 = vmatpush1.msra.mxu0 %v610
    %656 = vmatprep.subr.mxu0 0.0
    %657 = vmatpush1.msra.mxu0 %v609
    %658 = vmatprep.subr.mxu0 0.0
    %659 = vmatpush1.msra.mxu0 %v608
    %660 = vmatprep.subr.mxu0 0.0
    %661 = vmatpush1.msra.mxu0 %v607
    %662 = vmatprep.subr.mxu0 0.0
    %663 = vmatpush2.msra.mxu0 0.0
    %664 = vmatprep.subr.mxu0 0.0
    %665 = vmatpush2.msra.mxu0 0.0
    %666 = vmatprep.subr.mxu0 0.0
    %667 = vmatpush2.msra.mxu0 0.0
    %668 = vmatprep.subr.mxu0 0.0
    %669 = vmatpush2.msra.mxu0 0.0
    %670 = vmatprep.subr.mxu0 0.0
    %671 = vmatpush2.msra.mxu0 0.0
    %672 = vmatprep.subr.mxu0 0.0
    %673 = vmatpush2.msra.mxu0 0.0
    %674 = vmatprep.subr.mxu0 0.0
    %675 = vmatpush2.msra.mxu0 0.0
    %676 = vmatprep.subr.mxu0 0.0
    %677 = vmatpush2.msra.mxu0 0.0
    %678 = vmatprep.subr.mxu0 0.0
    %679 = vmatpush2.msra.mxu0 0.0
    %680 = vmatprep.subr.mxu0 0.0
    %681 = vmatpush2.msra.mxu0 0.0
    %682 = vmatprep.subr.mxu0 0.0
    %683 = vmatpush2.msra.mxu0 0.0
    %684 = vmatprep.subr.mxu0 0.0
    %685 = vmatpush2.msra.mxu0 0.0
    %686 = vmatprep.subr.mxu0 0.0
    %687 = vmatpush2.msra.mxu0 0.0
    %688 = vmatprep.subr.mxu0 0.0
    %689 = vmatpush2.msra.mxu0 0.0
    %690 = vmatprep.subr.mxu0 0.0
    %691 = vmatpush2.msra.mxu0 0.0
    %692 = vmatprep.subr.mxu0 0.0
    %693 = vmatpush2.msra.mxu0 0.0
    %694 = vmatprep.mubr.f32.mxu0 0.0
    %695 = vmatmul.mubr.f32.gmra.mxu0 %v606
    %v696 = vpop.f32.mrf.mxu0
    %v697 = vadd.f32 %v628, %v696
    %v698 = vpop.f32.mrf.mxu0
    %699 = vdwg.mxu0
    %700 = vst [vmem:[%s13] sm:$0xff] %v697
    // Predicated region
    $region78: #{mlp_decoder_forward.1} parent=1 // pred_check
      _
    $region79: #{mlp_decoder_forward.1} parent=1 // pred_check_branch
      %702 = sbr.rel (0) target = $region81
    $region80: #{mlp_decoder_forward.1} parent=1 // pred_region
      _
    $region81: #{mlp_decoder_forward.1} parent=1 // pred_fallthru
      _
    // Predicated region
    $region82: #{mlp_decoder_forward.1} parent=1 // pred_check
      _
    $region83: #{mlp_decoder_forward.1} parent=1 // pred_check_branch
      %704 = sbr.rel (0) target = $region85
    $region84: #{mlp_decoder_forward.1} parent=1 // pred_region
      _
    $region85: #{mlp_decoder_forward.1} parent=1 // pred_fallthru
      _
    %705 = vsyncpa [#allocation3], 1
    %706 = vsyncpa [#allocation5], 1
    %707 = vsyncpa [#allocation8], 1
    %708 = vsyncpa [#allocation11], 1

</llo_original>
